<compile_context>
chip_gen: v5e
topology: v5e:2x2
jax: 0.10.0
libtpu: 0.0.40
codegen_flags: <defaults>
</compile_context>

<pallas_src>
import functools

import jax
import jax.numpy as jnp
from jax.experimental import pallas as pl
from jax.experimental.pallas import tpu as pltpu

EPS = 0.1          # label-smoothing epsilon
LANES = 128        # TPU lane width; num_tags padded to this
NEG_BIG = -1e30    # finite "-inf" for padded tag columns (avoids 0*inf NaNs)


def cls_head_kernel(cls_ref, mask_ref, labels_ref, w_ref, b_ref,
                    logits_ref, loss_ref, pred_ref, *, num_tags):
    # ---- 2. CLS linear: (cls @ W^T) * mask + b  (mask per-row -> equivalent
    #         to masking cls, but B*Tp mults instead of B*H, and f32 only) ----
    mm = jax.lax.dot_general(
        cls_ref[...], w_ref[...],                        # [Bt,H] x [Tp,H], contract last dims
        dimension_numbers=(((1,), (1,)), ((), ())),
        preferred_element_type=jnp.float32)
    logits = mm * mask_ref[...] + b_ref[...]             # [Bt, Tp] f32
    logits_ref[...] = logits

    Bt, Tp = logits.shape

    # ---- 3. label-smoothing cross entropy per row (reduction='none') -------
    m = jnp.max(logits, axis=-1, keepdims=True)          # reused for argmax
    shifted = logits - m
    lse = jnp.log(jnp.sum(jnp.exp(shifted), axis=-1, keepdims=True))
    logp = shifted - lse                                  # log_softmax

    col = jax.lax.broadcasted_iota(jnp.int32, (Bt, Tp), 1)
    valid = (col < num_tags).astype(jnp.float32)          # exclude padded tags
    onehot = (col == labels_ref[...]).astype(jnp.float32)
    # fused single reduce:  (eps/T)*(-sum logp) + (1-eps)*(-logp[label])
    wmix = valid * (EPS / num_tags) + (1.0 - EPS) * onehot
    loss_ref[...] = -jnp.sum(logp * wmix, axis=-1, keepdims=True)

    # ---- 4. pred = argmax (first max index); padded cols hold NEG_BIG ------
    pred_ref[...] = jnp.min(jnp.where(logits == m, col, Tp),
                            axis=-1, keepdims=True).astype(jnp.int32)


def _round_up(x, m):
    return (x + m - 1) // m * m


def classify_cls_forward(seq_out, attention_masks, labels, tags_w, tags_b):
    """seq_out: [B,S,H] (encoder-native dtype, e.g. bf16), attention_masks: [B,S],
       labels: [B] int, tags_w: [T,H] (PyTorch nn.Linear layout), tags_b: [T]."""
    B, S, H = seq_out.shape
    T = tags_w.shape[0]
    Tp = _round_up(T, LANES)

    # Slice the CLS token before the kernel: only [B,H] ever crosses HBM->VMEM,
    # never the full [B,S,H] encoder output.  Kept in native (bf16) dtype.
    cls = seq_out[:, 0, :]
    w = tags_w.astype(cls.dtype)
    mask_cls = attention_masks[:, 0:1].astype(jnp.float32)   # [B, 1]
    labels2d = labels.reshape(B, 1).astype(jnp.int32)        # [B, 1]

    # Pad tags to a full 128-lane tile (lane-dense logits store, dense MXU N).
    w_p = jnp.zeros((Tp, H), dtype=w.dtype).at[:T, :].set(w)
    b_p = jnp.full((1, Tp), NEG_BIG, dtype=jnp.float32).at[0, :T].set(
        tags_b.astype(jnp.float32))

    # Batch tiling: double-buffered cls tiles kept under ~8 MiB so they fit
    # v5e's 16 MiB default scoped VMEM and v7x's 64 MiB physical VMEM.
    itemsize = jnp.dtype(cls.dtype).itemsize
    bt = max(8, min(1024, (8 * 1024 * 1024) // (2 * H * itemsize)))
    bt = _round_up(min(bt, _round_up(B, 8)), 8)
    Bp = _round_up(B, bt)
    n_tiles = Bp // bt

    pad_rows = Bp - B
    if pad_rows:
        cls = jnp.pad(cls, ((0, pad_rows), (0, 0)))
        mask_cls = jnp.pad(mask_cls, ((0, pad_rows), (0, 0)))
        labels2d = jnp.pad(labels2d, ((0, pad_rows), (0, 0)))

    kernel = functools.partial(cls_head_kernel, num_tags=T)

    logits_p, loss_rows, pred_p = pl.pallas_call(
        kernel,
        grid=(n_tiles,),
        in_specs=[
            pl.BlockSpec((bt, H), lambda i: (i, 0)),     # cls tile (bf16)
            pl.BlockSpec((bt, 1), lambda i: (i, 0)),     # CLS mask
            pl.BlockSpec((bt, 1), lambda i: (i, 0)),     # labels
            pl.BlockSpec((Tp, H), lambda i: (0, 0)),     # W (broadcast, tiny)
            pl.BlockSpec((1, Tp), lambda i: (0, 0)),     # b (broadcast, tiny)
        ],
        out_specs=(
            pl.BlockSpec((bt, Tp), lambda i: (i, 0)),    # logits (lane-dense)
            pl.BlockSpec((bt, 1), lambda i: (i, 0)),     # per-row loss
            pl.BlockSpec((bt, 1), lambda i: (i, 0)),     # pred
        ),
        out_shape=(
            jax.ShapeDtypeStruct((Bp, Tp), jnp.float32),
            jax.ShapeDtypeStruct((Bp, 1), jnp.float32),
            jax.ShapeDtypeStruct((Bp, 1), jnp.int32),
        ),
        compiler_params=pltpu.CompilerParams(
            dimension_semantics=("parallel",)),
    )(cls, mask_cls, labels2d, w_p, b_p)

    logits = logits_p[:B, :T]
    loss = jnp.mean(loss_rows[:B, 0])   # criterion(..., reduction='none').mean()
    pred = pred_p[:B]
    return {"logits": logits, "loss": loss, "pred": pred}


def _reference(seq_out, attention_masks, labels, tags_w, tags_b):
    seq_f32 = seq_out.astype(jnp.float32)
    masked = seq_f32 * attention_masks[:, :, None].astype(jnp.float32)
    logits = masked[:, 0, :] @ tags_w.astype(jnp.float32).T + tags_b
    T = logits.shape[-1]
    logp = jax.nn.log_softmax(logits, axis=-1)
    nll = -jnp.take_along_axis(logp, labels[:, None], axis=-1)[:, 0]
    smooth = -jnp.sum(logp, axis=-1)
    loss = jnp.mean((EPS / T) * smooth + (1.0 - EPS) * nll)
    pred = jnp.argmax(logits, axis=-1)[:, None].astype(jnp.int32)
    return logits, loss, pred


if __name__ == "__main__":
    # Small shapes consistent with the module: batch=2, seq=8, hidden=32, num_tags=5
    B, S, H, T = 2, 8, 32, 5
    key = jax.random.PRNGKey(0)
    k1, k2, k3, k4 = jax.random.split(key, 4)

    # encoder output in bf16 (exercises the native-dtype path of the kernel)
    seq_out = jax.random.normal(k1, (B, S, H), dtype=jnp.float32).astype(jnp.bfloat16)
    attention_masks = (jax.random.uniform(k2, (B, S)) > 0.2).astype(jnp.float32)
    attention_masks = attention_masks.at[:, 0].set(1.0)  # CLS always attended
    labels = jax.random.randint(k3, (B,), 0, T, dtype=jnp.int32)

    # nn.Linear: random weight, zero bias (per _init_weights)
    tags_w = (0.02 * jax.random.normal(k4, (T, H), dtype=jnp.float32)).astype(jnp.bfloat16)
    tags_b = jnp.zeros((T,), dtype=jnp.float32)

    out = classify_cls_forward(seq_out, attention_masks, labels, tags_w, tags_b)
    jax.block_until_ready(out)

    ref_logits, ref_loss, ref_pred = _reference(seq_out, attention_masks, labels,
                                                tags_w, tags_b)
    assert jnp.allclose(out["logits"], ref_logits, atol=1e-4, rtol=1e-4)
    assert jnp.allclose(out["loss"], ref_loss, atol=1e-4, rtol=1e-4)
    assert jnp.array_equal(out["pred"][:, 0], ref_pred[:, 0])

    print("KERNEL_OK")
</pallas_src>

<mosaic_0001>
module attributes {stable_mosaic.version = 11 : i64} {
  func.func @cls_head_kernel(%arg0: i32, %arg1: memref<8x32xbf16, #tpu.memory_space<vmem>>, %arg2: memref<8x1xf32, #tpu.memory_space<vmem>>, %arg3: memref<8x1xi32, #tpu.memory_space<vmem>>, %arg4: memref<128x32xbf16, #tpu.memory_space<vmem>>, %arg5: memref<1x128xf32, #tpu.memory_space<vmem>>, %arg6: memref<8x128xf32, #tpu.memory_space<vmem>>, %arg7: memref<8x1xf32, #tpu.memory_space<vmem>>, %arg8: memref<8x1xi32, #tpu.memory_space<vmem>>) attributes {dimension_semantics = [#tpu.dimension_semantics<parallel>], iteration_bounds = array<i64: 1>, scalar_prefetch = 0 : i64, scratch_operands = 0 : i64, tpu.core_type = #tpu.core_type<tc>, window_params = [{transform_indices = @transform_0, window_bounds = array<i64: 8, 32>}, {transform_indices = @transform_1, window_bounds = array<i64: 8, 1>}, {transform_indices = @transform_2, window_bounds = array<i64: 8, 1>}, {pipeline_mode = #tpu.pipeline_mode<synchronous>, transform_indices = @transform_3, window_bounds = array<i64: 128, 32>}, {pipeline_mode = #tpu.pipeline_mode<synchronous>, transform_indices = @transform_4, window_bounds = array<i64: 1, 128>}, {transform_indices = @transform_5, window_bounds = array<i64: 8, 128>}, {transform_indices = @transform_6, window_bounds = array<i64: 8, 1>}, {transform_indices = @transform_7, window_bounds = array<i64: 8, 1>}]} {
    %c0 = arith.constant 0 : index
    %c0_0 = arith.constant 0 : index
    %0 = vector.load %arg1[%c0, %c0_0] : memref<8x32xbf16, #tpu.memory_space<vmem>>, vector<8x32xbf16>
    %c0_1 = arith.constant 0 : index
    %c0_2 = arith.constant 0 : index
    %1 = vector.load %arg4[%c0_1, %c0_2] : memref<128x32xbf16, #tpu.memory_space<vmem>>, vector<128x32xbf16>
    %cst = arith.constant dense<0.000000e+00> : vector<8x128xf32>
    %2 = tpu.matmul %0, %1, %cst {dimension_numbers = #tpu.dot_dimension_numbers<[1], [1], [0], [0], [0, 0, 1, 0], [], []>} : vector<8x32xbf16>, vector<128x32xbf16>, vector<8x128xf32> -> vector<8x128xf32>
    %c0_3 = arith.constant 0 : index
    %c0_4 = arith.constant 0 : index
    %3 = vector.load %arg2[%c0_3, %c0_4] : memref<8x1xf32, #tpu.memory_space<vmem>>, vector<8x1xf32>
    %4 = vector.broadcast %3 : vector<8x1xf32> to vector<8x128xf32>
    %5 = arith.mulf %2, %4 : vector<8x128xf32>
    %c0_5 = arith.constant 0 : index
    %c0_6 = arith.constant 0 : index
    %6 = vector.load %arg5[%c0_5, %c0_6] : memref<1x128xf32, #tpu.memory_space<vmem>>, vector<1x128xf32>
    %7 = vector.broadcast %6 : vector<1x128xf32> to vector<8x128xf32>
    %8 = arith.addf %5, %7 : vector<8x128xf32>
    %c0_7 = arith.constant 0 : index
    %c0_8 = arith.constant 0 : index
    %9 = vector.load %arg6[%c0_7, %c0_8] : memref<8x128xf32, #tpu.memory_space<vmem>>, vector<8x128xf32>
    tpu.vector_store %arg6[%c0_7, %c0_8], %8 {strides = array<i32>} : memref<8x128xf32, #tpu.memory_space<vmem>>, vector<8x128xf32>,
    %cst_9 = arith.constant dense<0xFF800000> : vector<8xf32>
    %10 = vector.multi_reduction <maximumf>, %8, %cst_9 [1] : vector<8x128xf32> to vector<8xf32>
    %11 = vector.shape_cast %10 : vector<8xf32> to vector<8x1xf32>
    %12 = vector.broadcast %11 : vector<8x1xf32> to vector<8x128xf32>
    %13 = arith.subf %8, %12 : vector<8x128xf32>
    %14 = math.exp %13 : vector<8x128xf32>
    %cst_10 = arith.constant dense<0.000000e+00> : vector<8xf32>
    %15 = vector.multi_reduction <add>, %14, %cst_10 [1] : vector<8x128xf32> to vector<8xf32>
    %16 = vector.shape_cast %15 : vector<8xf32> to vector<8x1xf32>
    %17 = math.log %16 : vector<8x1xf32>
    %18 = vector.broadcast %17 : vector<8x1xf32> to vector<8x128xf32>
    %19 = arith.subf %13, %18 : vector<8x128xf32>
    %20 = tpu.iota {dimensions = array<i32: 1>} : vector<8x128xi32>
    %c5_i32 = arith.constant 5 : i32
    %21 = vector.broadcast %c5_i32 : i32 to vector<8x128xi32>
    %22 = arith.cmpi slt, %20, %21 : vector<8x128xi32>
    %23 = arith.extui %22 : vector<8x128xi1> to vector<8x128xi32>
    %24 = arith.sitofp %23 : vector<8x128xi32> to vector<8x128xf32>
    %c0_11 = arith.constant 0 : index
    %c0_12 = arith.constant 0 : index
    %25 = vector.load %arg3[%c0_11, %c0_12] : memref<8x1xi32, #tpu.memory_space<vmem>>, vector<8x1xi32>
    %26 = vector.broadcast %25 : vector<8x1xi32> to vector<8x128xi32>
    %27 = arith.cmpi eq, %20, %26 : vector<8x128xi32>
    %28 = arith.extui %27 : vector<8x128xi1> to vector<8x128xi32>
    %29 = arith.sitofp %28 : vector<8x128xi32> to vector<8x128xf32>
    %cst_13 = arith.constant 2.000000e-02 : f32
    %30 = vector.broadcast %cst_13 : f32 to vector<8x128xf32>
    %31 = arith.mulf %24, %30 : vector<8x128xf32>
    %cst_14 = arith.constant 0.899999976 : f32
    %32 = vector.broadcast %cst_14 : f32 to vector<8x128xf32>
    %33 = arith.mulf %32, %29 : vector<8x128xf32>
    %34 = arith.addf %31, %33 : vector<8x128xf32>
    %35 = arith.mulf %19, %34 : vector<8x128xf32>
    %cst_15 = arith.constant dense<0.000000e+00> : vector<8xf32>
    %36 = vector.multi_reduction <add>, %35, %cst_15 [1] : vector<8x128xf32> to vector<8xf32>
    %37 = vector.shape_cast %36 : vector<8xf32> to vector<8x1xf32>
    %cst_16 = arith.constant 0.000000e+00 : f32
    %38 = vector.broadcast %cst_16 : f32 to vector<8x1xf32>
    %39 = arith.subf %38, %37 : vector<8x1xf32>
    %c0_17 = arith.constant 0 : index
    %c0_18 = arith.constant 0 : index
    %40 = vector.load %arg7[%c0_17, %c0_18] : memref<8x1xf32, #tpu.memory_space<vmem>>, vector<8x1xf32>
    tpu.vector_store %arg7[%c0_17, %c0_18], %39 {strides = array<i32>} : memref<8x1xf32, #tpu.memory_space<vmem>>, vector<8x1xf32>,
    %41 = vector.broadcast %11 : vector<8x1xf32> to vector<8x128xf32>
    %42 = arith.cmpf oeq, %8, %41 : vector<8x128xf32>
    %c128_i32 = arith.constant 128 : i32
    %43 = vector.broadcast %c128_i32 : i32 to vector<8x128xi32>
    %44 = arith.select %42, %20, %43 : vector<8x128xi1>, vector<8x128xi32>
    %cst_19 = arith.constant dense<2147483647> : vector<8xi32>
    %45 = vector.multi_reduction <minsi>, %44, %cst_19 [1] : vector<8x128xi32> to vector<8xi32>
    %46 = vector.shape_cast %45 : vector<8xi32> to vector<8x1xi32>
    %c0_20 = arith.constant 0 : index
    %c0_21 = arith.constant 0 : index
    %47 = vector.load %arg8[%c0_20, %c0_21] : memref<8x1xi32, #tpu.memory_space<vmem>>, vector<8x1xi32>
    tpu.vector_store %arg8[%c0_20, %c0_21], %46 {strides = array<i32>} : memref<8x1xi32, #tpu.memory_space<vmem>>, vector<8x1xi32>,
    return
  }
  func.func @transform_0(%arg0: i32) -> (i32, i32) {
    %c0_i32 = arith.constant 0 : i32
    %c0_i32_0 = arith.constant 0 : i32
    return %arg0, %c0_i32 : i32, i32
  }
  func.func @transform_1(%arg0: i32) -> (i32, i32) {
    %c0_i32 = arith.constant 0 : i32
    %c0_i32_0 = arith.constant 0 : i32
    return %arg0, %c0_i32 : i32, i32
  }
  func.func @transform_2(%arg0: i32) -> (i32, i32) {
    %c0_i32 = arith.constant 0 : i32
    %c0_i32_0 = arith.constant 0 : i32
    return %arg0, %c0_i32 : i32, i32
  }
  func.func @transform_3(%arg0: i32) -> (i32, i32) {
    %c0_i32 = arith.constant 0 : i32
    %c0_i32_0 = arith.constant 0 : i32
    %c0_i32_1 = arith.constant 0 : i32
    return %c0_i32, %c0_i32_0 : i32, i32
  }
  func.func @transform_4(%arg0: i32) -> (i32, i32) {
    %c0_i32 = arith.constant 0 : i32
    %c0_i32_0 = arith.constant 0 : i32
    %c0_i32_1 = arith.constant 0 : i32
    return %c0_i32, %c0_i32_0 : i32, i32
  }
  func.func @transform_5(%arg0: i32) -> (i32, i32) {
    %c0_i32 = arith.constant 0 : i32
    %c0_i32_0 = arith.constant 0 : i32
    return %arg0, %c0_i32 : i32, i32
  }
  func.func @transform_6(%arg0: i32) -> (i32, i32) {
    %c0_i32 = arith.constant 0 : i32
    %c0_i32_0 = arith.constant 0 : i32
    return %arg0, %c0_i32 : i32, i32
  }
  func.func @transform_7(%arg0: i32) -> (i32, i32) {
    %c0_i32 = arith.constant 0 : i32
    %c0_i32_0 = arith.constant 0 : i32
    return %arg0, %c0_i32 : i32, i32
  }
}

</mosaic_0001>

<llo_original>
// kernel: tpu_custom_call.1
$region0: #{tpu_custom_call.1}
  #allocation0 [shape = 'u32[]', space=smem, size = 0x4, offset = 0x4, fixed_abs, tag = 'smem constant byte address 0x4 - core index']
  #allocation1 [shape = 'u32[72,128]{1,0:T(1,128)}', space=vmem, size = 0x9000, scoped, tag = 'internal scratch']
  %s0 = inlined_call_operand.vmem [shape: bf16[8,32], index: 0, kind: input, shape index: {}]
  %s1 = inlined_call_operand.vmem [shape: f32[8,1], index: 1, kind: input, shape index: {}]
  %s2 = inlined_call_operand.vmem [shape: s32[8,1], index: 2, kind: input, shape index: {}]
  %s3 = inlined_call_operand.vmem [shape: bf16[128,32], index: 3, kind: input, shape index: {}]
  %s4 = inlined_call_operand.vmem [shape: f32[1,128], index: 4, kind: input, shape index: {}]
  %s5 = inlined_call_operand.hbm [shape: f32[8,128], index: 5, kind: output, shape index: {0}]
  %s6 = inlined_call_operand.vmem [shape: f32[8,1], index: 6, kind: output, shape index: {1}]
  %s7 = inlined_call_operand.vmem [shape: s32[8,1], index: 7, kind: output, shape index: {2}]
  %8 = xla_tuple %s5, %s6, %s7
  %s9 = sld [smem:[#allocation0]]
  $region46: #{tpu_custom_call.1} parent=0
    _
  %s11 = ssub.s32 1, %s9
  %s12 = scalar_select 0, %s11, %s9
  $region1: #{tpu_custom_call.1} parent=0
    #allocation2 [shape = 'u8[4096]{0}', space=vmem, size = 0x1000, scoped, tag = 'output window, operand 0, single buffered']
    #allocation3 [shape = 's32[1]{0}', space=sflag, size = 0x4, scoped, tag = 'scoped memory for tpu_custom_call.1']
    %13 = vsyncpa [#allocation3], 0
    // Predicated region
    $region2: #{tpu_custom_call.1} parent=1 // pred_check
      _
    $region3: #{tpu_custom_call.1} parent=1 // pred_check_branch
      %15 = sbr.rel (0) target = $region5
    $region4: #{tpu_custom_call.1} parent=1 // pred_region
      _
    $region5: #{tpu_custom_call.1} parent=1 // pred_fallthru
      _
    // Predicated region
    $region6: #{tpu_custom_call.1} parent=1 // pred_check
      _
    $region7: #{tpu_custom_call.1} parent=1 // pred_check_branch
      %17 = sbr.rel (0) target = $region9
    $region8: #{tpu_custom_call.1} parent=1 // pred_region
      _
    $region9: #{tpu_custom_call.1} parent=1 // pred_fallthru
      _
    // Predicated region
    $region10: #{tpu_custom_call.1} parent=1 // pred_check
      _
    $region11: #{tpu_custom_call.1} parent=1 // pred_check_branch
      %19 = sbr.rel (0) target = $region13
    $region12: #{tpu_custom_call.1} parent=1 // pred_region
      _
    $region13: #{tpu_custom_call.1} parent=1 // pred_fallthru
      _
    // Predicated region
    $region14: #{tpu_custom_call.1} parent=1 // pred_check
      _
    $region15: #{tpu_custom_call.1} parent=1 // pred_check_branch
      %21 = sbr.rel (0) target = $region17
    $region16: #{tpu_custom_call.1} parent=1 // pred_region
      _
    $region17: #{tpu_custom_call.1} parent=1 // pred_fallthru
      _
    // Predicated region
    $region18: #{tpu_custom_call.1} parent=1 // pred_check
      _
    $region19: #{tpu_custom_call.1} parent=1 // pred_check_branch
      %23 = sbr.rel (0) target = $region21
    $region20: #{tpu_custom_call.1} parent=1 // pred_region
      _
    $region21: #{tpu_custom_call.1} parent=1 // pred_fallthru
      _
    %v24 = vld [vmem:[%s0] sm:$0xf]
    %v25 = vld [vmem:[%s3] sm:$0xf]
    %v26 = vld [vmem:[%s3 + $0x4] sm:$0xf]
    %v27 = vld [vmem:[%s3 + $0x8] sm:$0xf]
    %v28 = vld [vmem:[%s3 + $0xc] sm:$0xf]
    %v29 = vld [vmem:[%s3 + $0x10] sm:$0xf]
    %v30 = vld [vmem:[%s3 + $0x14] sm:$0xf]
    %v31 = vld [vmem:[%s3 + $0x18] sm:$0xf]
    %v32 = vld [vmem:[%s3 + $0x1c] sm:$0xf]
    %v33 = vld [vmem:[%s3 + $0x20] sm:$0xf]
    %v34 = vld [vmem:[%s3 + $0x24] sm:$0xf]
    %v35 = vld [vmem:[%s3 + $0x28] sm:$0xf]
    %v36 = vld [vmem:[%s3 + $0x2c] sm:$0xf]
    %v37 = vld [vmem:[%s3 + $0x30] sm:$0xf]
    %v38 = vld [vmem:[%s3 + $0x34] sm:$0xf]
    %v39 = vld [vmem:[%s3 + $0x38] sm:$0xf]
    %v40 = vld [vmem:[%s3 + $0x3c] sm:$0xf]
    %v57 = vunpack.c.l.b16 %v25
    %v58 = vunpack.c.l.b16 %v26
    %v59 = vunpack.c.l.b16 %v27
    %v60 = vunpack.c.l.b16 %v28
    %v61 = vunpack.c.l.b16 %v29
    %v62 = vunpack.c.l.b16 %v30
    %v63 = vunpack.c.l.b16 %v31
    %v64 = vunpack.c.l.b16 %v32
    %v65 = vunpack.c.l.b16 %v33
    %v66 = vunpack.c.l.b16 %v34
    %v67 = vunpack.c.l.b16 %v35
    %v68 = vunpack.c.l.b16 %v36
    %v69 = vunpack.c.l.b16 %v37
    %v70 = vunpack.c.l.b16 %v38
    %v71 = vunpack.c.l.b16 %v39
    %v72 = vunpack.c.l.b16 %v40
    %v73 = vpack.c.b16 %v58, %v57
    %v74 = vpack.c.b16 %v60, %v59
    %v75 = vpack.c.b16 %v62, %v61
    %v76 = vpack.c.b16 %v64, %v63
    %v77 = vpack.c.b16 %v66, %v65
    %v78 = vpack.c.b16 %v68, %v67
    %v79 = vpack.c.b16 %v70, %v69
    %v80 = vpack.c.b16 %v72, %v71
    %vm81 = vcmask 261120
    %v83 = vsel %vm81, %v24, 0
    %v86 = vsel %vm81, %v73, 0
    %v89 = vsel %vm81, %v74, 0
    %v92 = vsel %vm81, %v75, 0
    %v95 = vsel %vm81, %v76, 0
    %v98 = vsel %vm81, %v77, 0
    %v101 = vsel %vm81, %v78, 0
    %v104 = vsel %vm81, %v79, 0
    %v107 = vsel %vm81, %v80, 0
    %109 = vmatpush.bf16.xpose.msra.mxu0 %v107
    %110 = vmatpush.bf16.xpose.msra.mxu0 %v104
    %111 = vmatpush.bf16.xpose.msra.mxu0 %v101
    %112 = vmatpush.bf16.xpose.msra.mxu0 %v98
    %113 = vmatpush.bf16.xpose.msra.mxu0 %v95
    %114 = vmatpush.bf16.xpose.msra.mxu0 %v92
    %115 = vmatpush.bf16.xpose.msra.mxu0 %v89
    %116 = vmatpush.bf16.xpose.msra.mxu0 %v86
    %117 = vmatmul.bf16.gmra.mxu0 %v83
    %v118 = vpop.f32.mrf.mxu0
    %v119 = vadd.f32 0.0, %v118
    %v120 = vpop.f32.mrf.mxu0
    %121 = vdwg.mxu0
    %v122 = vld [vmem:[%s1] sm:$0xff]
    %124 = vset.pattern.permute.xlu0 0
    %125 = vperm.xlu0 %124, %v122
    %v126 = vpop.permute.xlu0 %125
    %v128 = vmul.f32 %v119, %v126
    %v129 = vld [vmem:[%s4] sm:$0x1]
    %v131 = vperm.slane %v129, 0
    %v133 = vadd.f32 %v128, %v131
    %134 = vst [vmem:[#allocation2] sm:$0xff] %v133
    %135 = vmax.xlane.f32.xlu0 %v133
    %v136 = vpop.xlane.xlu0 %135
    %v137 = vsub.f32 %v133, %v136
    %v138 = vmul.f32 %v137, 1.442695
    %v139 = vpow.pop %v138
    %140 = vadd.xlane.f32.xlu0 %v139
    %v141 = vpop.xlane.xlu0 %140
    %v142 = vlog2.pop %v141
    %v143 = vmul.f32 %v142, 0.6931472
    %v144 = vsub.f32 %v137, %v143
    %v145 = vlaneseq
    %v146 = vand.u32 %v145, 127
    %vm147 = vcmp.lt.s32.totalorder %v146, 5
    %v148 = vsel %vm147, 1, 0
    %v149 = vcvt.s32.f32 %v148
    %v150 = vld [vmem:[%s2] sm:$0xff]
    %151 = vset.pattern.permute.xlu0 0
    %152 = vperm.xlu0 %151, %v150
    %v153 = vpop.permute.xlu0 %152
    %vm154 = vcmp.eq.s32.totalorder %v146, %v153
    %v155 = vsel %vm154, 1, 0
    %v156 = vcvt.s32.f32 %v155
    %v157 = vmul.f32 %v149, 0.02
    %v158 = vmul.f32 %v156, 0.9
    %v159 = vadd.f32 %v157, %v158
    %v160 = vmul.f32 %v144, %v159
    %161 = vadd.xlane.f32.xlu0 %v160
    %v162 = vpop.xlane.xlu0 %161
    %v163 = vsub.f32 0.0, %v162
    %vm164 = vcmask 7168
    %165 = vst.msk [vmem:[%s6] sm:$0xff] %vm164, %v163
    %vm166 = vcmp.eq.f32.partialorder %v133, %v136
    %v167 = vsel %vm166, %v146, 128
    %v168 = vand.u32 %v167, 65535
    %v169 = vshra.s32 %v167, 16
    %v170 = vcvt.s32.f32 %v168
    %v171 = vcvt.s32.f32 %v169
    %172 = vmin.xlane.f32.xlu0 %v171
    %v173 = vpop.xlane.xlu0 %172
    %vm174 = vcmp.eq.f32.partialorder %v171, %v173
    %v175 = vsel %vm174, %v170, inf
    %176 = vmin.xlane.f32.xlu0 %v175
    %v177 = vpop.xlane.xlu0 %176
    %v178 = vcvt.f32.s32 %v177
    %v179 = vcvt.f32.s32 %v173
    %v180 = vshll.u32 %v179, 16
    %v181 = vadd.s32 %v180, %v178
    %182 = vst.msk [vmem:[%s7] sm:$0xff] %vm164, %v181
    // Predicated region
    $region22: #{tpu_custom_call.1} parent=1 // pred_check
      _
    $region23: #{tpu_custom_call.1} parent=1 // pred_check_branch
      %184 = sbr.rel (0) target = $region25
    $region24: #{tpu_custom_call.1} parent=1 // pred_region
      %186 = vsyncadd [#allocation3], 0
      %s188 = sshll.u32 [#allocation2], 4
      %s189 = int_to_ptr.vmem [resolvable:$true] %s188
      %s190 = sshll.u32 %s5, 4
      %s191 = int_to_ptr.hbm [resolvable:$true] %s190
      %193 = dma.vmem_to_hbm [thread:$0]  %s189, 128, %s191, [#allocation3]
    $region25: #{tpu_custom_call.1} parent=1 // pred_fallthru
      _
    // Predicated region
    $region26: #{tpu_custom_call.1} parent=1 // pred_check
      _
    $region27: #{tpu_custom_call.1} parent=1 // pred_check_branch
      %195 = sbr.rel (0) target = $region29
    $region28: #{tpu_custom_call.1} parent=1 // pred_region
      _
    $region29: #{tpu_custom_call.1} parent=1 // pred_fallthru
      _
    // Predicated region
    $region30: #{tpu_custom_call.1} parent=1 // pred_check
      _
    $region31: #{tpu_custom_call.1} parent=1 // pred_check_branch
      %197 = sbr.rel (0) target = $region33
    $region32: #{tpu_custom_call.1} parent=1 // pred_region
      _
    $region33: #{tpu_custom_call.1} parent=1 // pred_fallthru
      _
    // Predicated region
    $region34: #{tpu_custom_call.1} parent=1 // pred_check
      _
    $region35: #{tpu_custom_call.1} parent=1 // pred_check_branch
      %199 = sbr.rel (0) target = $region37
    $region36: #{tpu_custom_call.1} parent=1 // pred_region
      %201 = dma.done [#allocation3], 128
    $region37: #{tpu_custom_call.1} parent=1 // pred_fallthru
      _
    // Predicated region
    $region38: #{tpu_custom_call.1} parent=1 // pred_check
      _
    $region39: #{tpu_custom_call.1} parent=1 // pred_check_branch
      %203 = sbr.rel (0) target = $region41
    $region40: #{tpu_custom_call.1} parent=1 // pred_region
      _
    $region41: #{tpu_custom_call.1} parent=1 // pred_fallthru
      _
    // Predicated region
    $region42: #{tpu_custom_call.1} parent=1 // pred_check
      _
    $region43: #{tpu_custom_call.1} parent=1 // pred_check_branch
      %205 = sbr.rel (0) target = $region45
    $region44: #{tpu_custom_call.1} parent=1 // pred_region
      _
    $region45: #{tpu_custom_call.1} parent=1 // pred_fallthru
      _
    %206 = vsyncpa [#allocation3], 1

</llo_original>
